<compile_context>
chip_gen: v7x
topology: tpu7x:2x2x1
jax: 0.10.0
libtpu: 0.0.40
codegen_flags: <defaults>
</compile_context>

<pallas_src>
import functools

import jax
import jax.numpy as jnp
from jax.experimental import pallas as pl
from jax.experimental.pallas import tpu as pltpu


def _identity_kernel(x_ref, o_ref):
    # Straight VMEM copy: one load + one store of the whole (8, 128) tile.
    o_ref[...] = x_ref[...]


@functools.partial(jax.jit, donate_argnums=0)
def pallas_identity(x: jax.Array) -> jax.Array:
    """Identity pass-through as a grid-less, input-aliased Pallas TPU kernel.

    NOTE: the argument is DONATED (required for input_output_aliases to take
    effect without a defensive copy); do not reuse `x` after calling this.
    """
    return pl.pallas_call(
        _identity_kernel,
        out_shape=jax.ShapeDtypeStruct(x.shape, x.dtype),
        in_specs=[pl.BlockSpec(memory_space=pltpu.MemorySpace.VMEM)],
        out_specs=pl.BlockSpec(memory_space=pltpu.MemorySpace.VMEM),
        # Output 0 aliases (donated) input 0: no separate output buffer.
        input_output_aliases={0: 0},
    )(x)


class DeCoderPallas:
    """JAX/Pallas equivalent of the (empty) PyTorch `DeCoder` module."""

    def __init__(self):
        # Reference __init__ defines no parameters.
        pass

    def identity(self, x: jax.Array) -> jax.Array:
        # Semantic no-op: returning x directly avoids all custom-call launch
        # overhead and DMA traffic (per review).  Use `pallas_identity` only
        # when the Pallas path must be exercised explicitly.
        return x

    def forward(self, x):
        # Reference forward() body is `pass` -> returns None; there is no
        # computation to translate, so we match that semantics exactly.
        # (Intentional: the Pallas data path is only reachable via .identity
        #  / pallas_identity, never via __call__.)
        return None

    def __call__(self, x):
        return self.forward(x)


if __name__ == "__main__":
    key = jax.random.PRNGKey(0)
    # Small decoder-like input: (seq=8, hidden=128) -> one (8, 128) f32 vreg tile.
    shape, dtype = (8, 128), jnp.float32
    x = jax.random.normal(key, shape, dtype=dtype)

    model = DeCoderPallas()

    # Fast path: identity is a pure pass-through (no kernel launch).
    y_fast = jax.block_until_ready(model.identity(x))

    # Pallas path: exercised explicitly; the argument is donated, so pass a
    # dedicated copy and never reuse it afterwards.
    x_donate = jnp.array(x)  # independent buffer to donate
    y_pallas = jax.block_until_ready(pallas_identity(x_donate))
    del x_donate  # donated buffer must not be reused

    # Compare against an independently regenerated reference.
    x_expected = jax.random.normal(jax.random.PRNGKey(0), shape, dtype=dtype)
    assert y_fast.shape == shape and y_fast.dtype == dtype
    assert y_pallas.shape == shape and y_pallas.dtype == dtype
    assert bool(jnp.allclose(y_fast, x_expected))
    assert bool(jnp.allclose(y_pallas, x_expected))

    # Exact-semantics forward of the reference module (returns None).
    out = model(x_expected)
    assert out is None

    print("KERNEL_OK")
</pallas_src>

<mosaic_0001>
module attributes {stable_mosaic.version = 11 : i64} {
  func.func @_identity_kernel(%arg0: memref<8x128xf32, #tpu.memory_space<vmem>>, %arg1: memref<8x128xf32, #tpu.memory_space<vmem>>) attributes {dimension_semantics = [], scalar_prefetch = 0 : i64, scratch_operands = 0 : i64, tpu.core_type = #tpu.core_type<tc>} {
    %c0 = arith.constant 0 : index
    %c0_0 = arith.constant 0 : index
    %0 = vector.load %arg0[%c0, %c0_0] : memref<8x128xf32, #tpu.memory_space<vmem>>, vector<8x128xf32>
    %c0_1 = arith.constant 0 : index
    %c0_2 = arith.constant 0 : index
    %1 = vector.load %arg1[%c0_1, %c0_2] : memref<8x128xf32, #tpu.memory_space<vmem>>, vector<8x128xf32>
    tpu.vector_store %arg1[%c0_1, %c0_2], %0 {strides = array<i32>} : memref<8x128xf32, #tpu.memory_space<vmem>>, vector<8x128xf32>,
    return
  }
}

</mosaic_0001>

<llo_original>
// kernel: pallas_identity.1
$region0: #{pallas_identity.1}
  #allocation0 [shape = 'u32[]', space=smem, size = 0x4, offset = 0x4, fixed_abs, tag = 'smem constant byte address 0x4 - core index']
  #allocation1 [shape = 'u32[144,128]{1,0:T(1,128)}', space=vmem, size = 0x12000, scoped, tag = 'internal scratch']
  %s0 = inlined_call_operand.hbm [shape: f32[8,128], index: 0, kind: input, shape index: {}, may-alias: {0,1}]
  %s1 = inlined_call_operand.hbm [shape: f32[8,128], index: 1, kind: output, shape index: {}, may-alias: {0,1}]
  %s2 = sld [smem:[#allocation0]]
  $region18: #{pallas_identity.1} parent=0
    _
  %s4 = ssub.s32 1, %s2
  %s5 = scalar_select 0, %s4, %s2
  $region1: #{pallas_identity.1} parent=0
    #allocation2 [shape = 'u8[4096]{0}', space=vmem, size = 0x1000, scoped, tag = 'input window, operand 0, single buffered']
    #allocation3 [shape = 's32[1]{0}', space=sflag, size = 0x4, scoped, tag = 'scoped memory for pallas_identity.1']
    #allocation4 [shape = 's32[1]{0}', space=sflag, size = 0x4, scoped, tag = 'scoped memory for pallas_identity.1']
    #allocation5 [shape = 'u8[4096]{0}', space=vmem, size = 0x1000, scoped, tag = 'output window, operand 0, single buffered']
    %6 = vsyncpa [#allocation3], 0
    %7 = vsyncpa [#allocation4], 0
    // Predicated region
    $region2: #{pallas_identity.1} parent=1 // pred_check
      _
    $region3: #{pallas_identity.1} parent=1 // pred_check_branch
      %9 = sbr.rel (0) target = $region5
    $region4: #{pallas_identity.1} parent=1 // pred_region
      %s11 = ssub.s32 128, 128
      %12 = vsyncadd [#allocation3], %s11
      %s14 = sshll.u32 [#allocation2], 4
      %s15 = int_to_ptr.vmem [resolvable:$true] %s14
      %17 = dma.hbm_to_vmem [thread:$0]  %s0, 128, %s15, [#allocation3]
    $region5: #{pallas_identity.1} parent=1 // pred_fallthru
      _
    // Predicated region
    $region6: #{pallas_identity.1} parent=1 // pred_check
      _
    $region7: #{pallas_identity.1} parent=1 // pred_check_branch
      %19 = sbr.rel (0) target = $region9
    $region8: #{pallas_identity.1} parent=1 // pred_region
      %20 = dma.done [#allocation3], 128
    $region9: #{pallas_identity.1} parent=1 // pred_fallthru
      _
    %v21 = vld [vmem:[#allocation2] sm:$0xff]
    %22 = vst [vmem:[#allocation5] sm:$0xff] %v21
    // Predicated region
    $region10: #{pallas_identity.1} parent=1 // pred_check
      _
    $region11: #{pallas_identity.1} parent=1 // pred_check_branch
      %24 = sbr.rel (0) target = $region13
    $region12: #{pallas_identity.1} parent=1 // pred_region
      %s26 = ssub.s32 128, 128
      %27 = vsyncadd [#allocation4], %s26
      %s29 = sshll.u32 [#allocation5], 4
      %s30 = int_to_ptr.vmem [resolvable:$true] %s29
      %32 = dma.vmem_to_hbm [thread:$0]  %s30, 128, %s1, [#allocation4]
    $region13: #{pallas_identity.1} parent=1 // pred_fallthru
      _
    // Predicated region
    $region14: #{pallas_identity.1} parent=1 // pred_check
      _
    $region15: #{pallas_identity.1} parent=1 // pred_check_branch
      %34 = sbr.rel (0) target = $region17
    $region16: #{pallas_identity.1} parent=1 // pred_region
      %35 = dma.done [#allocation4], 128
    $region17: #{pallas_identity.1} parent=1 // pred_fallthru
      _
    %36 = vsyncpa [#allocation3], 1
    %37 = vsyncpa [#allocation4], 1

</llo_original>
